<compile_context>
chip_gen: v6e
topology: v6e:2x2x1
jax: 0.10.0
libtpu: 0.0.40
codegen_flags: <defaults>
</compile_context>

<pallas_src>
import functools

import jax
import jax.numpy as jnp
import numpy as np
from jax.experimental import pallas as pl
from jax.experimental.pallas import tpu as pltpu

_EPS = 1e-5
_BLOCK_BYTE_BUDGET = 2 * 1024 * 1024   # f32 working-copy budget per L-tile
_ROW_CAP = 2048                        # max rows per L-tile


def _row_stats(x):
    """Per-row mean and biased variance of an (Lt, D) f32 tile; reductions on the MXU."""
    d = x.shape[-1]
    ones = jnp.ones((d, 1), dtype=jnp.float32)
    inv_d = jnp.float32(1.0 / d)
    s1 = jnp.dot(x, ones, preferred_element_type=jnp.float32)      # (Lt, 1)  sum(x)
    s2 = jnp.dot(x * x, ones, preferred_element_type=jnp.float32)  # (Lt, 1)  sum(x^2)
    mu = s1 * inv_d
    var = jnp.maximum(s2 * inv_d - mu * mu, 0.0)                   # clamp cancellation
    return mu, var


def _ln_withbias_kernel(x_ref, w_ref, b_ref, o_ref):
    # x_ref: (1, Lt, D)   w_ref/b_ref: (1, D)   o_ref: (1, D, Lt)
    x = x_ref[0].astype(jnp.float32)                               # (Lt, D)
    mu, var = _row_stats(x)
    r = jax.lax.rsqrt(var + _EPS)
    y = (x - mu) * r * w_ref[0].astype(jnp.float32) + b_ref[0].astype(jnp.float32)
    # Cast first, then the fused permute(0, 2, 1) of the tile (less XLU/store traffic).
    o_ref[0] = jnp.transpose(y.astype(o_ref.dtype), (1, 0))


def _ln_biasfree_kernel(x_ref, w_ref, o_ref):
    # x_ref: (1, Lt, D)   w_ref: (1, D)   o_ref: (1, D, Lt)
    x = x_ref[0].astype(jnp.float32)                               # (Lt, D)
    _, var = _row_stats(x)
    r = jax.lax.rsqrt(var + _EPS)
    y = (x * r) * w_ref[0].astype(jnp.float32)                     # note: x NOT centered
    o_ref[0] = jnp.transpose(y.astype(o_ref.dtype), (1, 0))


def _round_up(n, m):
    return ((n + m - 1) // m) * m


def _choose_l_tile(l128, d):
    """Pick a 128-multiple L tile.

    Prefers a tile that exactly divides the 128-rounded length (minimal padding);
    otherwise accepts extra padding to keep the tile large (fewer grid steps).
    Returns (l_tile, padded_L).
    """
    budget_rows = max(_BLOCK_BYTE_BUDGET // max(d * 4, 1), 128)
    max_units = max(1, min(budget_rows, _ROW_CAP) // 128)
    units = l128 // 128
    best = 1
    for g in range(1, max_units + 1):
        if units % g == 0:
            best = g
    if best == units or best * 4 >= max_units:
        return best * 128, l128
    l_tile = max_units * 128
    return l_tile, _round_up(l128, l_tile)


@functools.partial(jax.jit, static_argnames=("layernorm_type",))
def f_layer_norm(x, weight, bias=None, layernorm_type="WithBias"):
    """x: (B, L, D) -> LayerNorm over D, then permute(0, 2, 1) -> (B, D, L)."""
    B, L, D = x.shape
    out_dtype = x.dtype
    with_bias = layernorm_type != "BiasFree"

    kernel = _ln_withbias_kernel if with_bias else _ln_biasfree_kernel
    params = (weight.reshape(1, D), bias.reshape(1, D)) if with_bias \
        else (weight.reshape(1, D),)

    if L * D * 4 <= _BLOCK_BYTE_BUDGET:
        # Fast path: one block per batch; block shapes equal the full array dims, so
        # no 128-padding / final slice is needed (no extra HBM round trips).
        grid = (B,)
        in_specs = [pl.BlockSpec((1, L, D), lambda b: (b, 0, 0))]
        in_specs += [pl.BlockSpec((1, D), lambda b: (0, 0))] * len(params)
        out_specs = pl.BlockSpec((1, D, L), lambda b: (b, 0, 0))
        out_shape = jax.ShapeDtypeStruct((B, D, L), out_dtype)
        dims = ("parallel",)
        x_in, L_pad = x, L
    else:
        # Tiled path for large L: 128-multiple L tiles, double-buffered pipelining.
        l128 = _round_up(L, 128)
        l_tile, L_pad = _choose_l_tile(l128, D)
        # Zero-pad the sequence axis so every block is full; padded rows are finite
        # (never NaN) and the pad is sliced off below.
        x_in = jnp.pad(x, ((0, 0), (0, L_pad - L), (0, 0))) if L_pad != L else x
        grid = (B, L_pad // l_tile)
        in_specs = [pl.BlockSpec((1, l_tile, D), lambda b, l: (b, l, 0))]
        in_specs += [pl.BlockSpec((1, D), lambda b, l: (0, 0))] * len(params)
        # Lane-dense transposed output block: last dim l_tile is a multiple of 128.
        out_specs = pl.BlockSpec((1, D, l_tile), lambda b, l: (b, 0, l))
        out_shape = jax.ShapeDtypeStruct((B, D, L_pad), out_dtype)
        dims = ("parallel", "parallel")

    out = pl.pallas_call(
        kernel,
        out_shape=out_shape,
        grid_spec=pltpu.PrefetchScalarGridSpec(
            num_scalar_prefetch=0,
            grid=grid,
            in_specs=in_specs,
            out_specs=out_specs,
        ),
        compiler_params=pltpu.CompilerParams(
            dimension_semantics=dims,
            vmem_limit_bytes=32 * 1024 * 1024,
        ),
    )(x_in, *params)

    if L_pad != L:
        out = out[:, :, :L]
    return out


def _reference(x, weight, bias, layernorm_type):
    x32 = x.astype(jnp.float32)
    mu = jnp.mean(x32, axis=-1, keepdims=True)
    var = jnp.mean((x32 - mu) ** 2, axis=-1, keepdims=True)
    if layernorm_type == "BiasFree":
        y = x32 / jnp.sqrt(var + 1e-5) * weight
    else:
        y = (x32 - mu) / jnp.sqrt(var + 1e-5) * weight + bias
    return jnp.transpose(y.astype(x.dtype), (0, 2, 1))


if __name__ == "__main__":
    key = jax.random.PRNGKey(0)
    ok = True

    # (2, 8, 32): small shape implied by the module (batch=2, seq=8, hidden=32).
    # (1, 1500, 64): non-128-multiple L hitting the padding-free fast path.
    # (1, 4000, 160): large L exercising the tiled path with tail padding.
    for (B, L, D) in [(2, 8, 32), (1, 1500, 64), (1, 4000, 160)]:
        key, kx, kw, kb = jax.random.split(key, 4)
        x = jax.random.normal(kx, (B, L, D), dtype=jnp.float32)
        weight = 1.0 + 0.1 * jax.random.normal(kw, (D,), dtype=jnp.float32)
        bias = 0.1 * jax.random.normal(kb, (D,), dtype=jnp.float32)

        for ln_type in ("WithBias", "BiasFree"):
            out = f_layer_norm(x, weight, bias, layernorm_type=ln_type)
            out = jax.block_until_ready(out)
            ref = _reference(x, weight, bias, ln_type)
            if out.shape != (B, D, L):
                ok = False
            elif not np.allclose(np.asarray(out), np.asarray(ref), atol=1e-4, rtol=1e-4):
                ok = False

    if ok:
        print("KERNEL_OK")
</pallas_src>

<mosaic_0001>
module attributes {stable_mosaic.version = 11 : i64} {
  func.func @_ln_withbias_kernel(%arg0: i32, %arg1: memref<1x8x32xf32, #tpu.memory_space<vmem>>, %arg2: memref<1x32xf32, #tpu.memory_space<vmem>>, %arg3: memref<1x32xf32, #tpu.memory_space<vmem>>, %arg4: memref<1x32x8xf32, #tpu.memory_space<vmem>>) attributes {dimension_semantics = [#tpu.dimension_semantics<parallel>], iteration_bounds = array<i64: 2>, scalar_prefetch = 0 : i64, scratch_operands = 0 : i64, tpu.core_type = #tpu.core_type<tc>, window_params = [{transform_indices = @transform_0, window_bounds = array<i64: 1, 8, 32>}, {pipeline_mode = #tpu.pipeline_mode<synchronous>, transform_indices = @transform_1, window_bounds = array<i64: 1, 32>}, {pipeline_mode = #tpu.pipeline_mode<synchronous>, transform_indices = @transform_2, window_bounds = array<i64: 1, 32>}, {transform_indices = @transform_3, window_bounds = array<i64: 1, 32, 8>}]} {
    %c0 = arith.constant 0 : index
    %c0_0 = arith.constant 0 : index
    %c0_1 = arith.constant 0 : index
    %0 = vector.load %arg1[%c0, %c0_0, %c0_1] : memref<1x8x32xf32, #tpu.memory_space<vmem>>, vector<1x8x32xf32>
    %1 = vector.shape_cast %0 : vector<1x8x32xf32> to vector<8x32xf32>
    %cst = arith.constant 1.000000e+00 : f32
    %2 = vector.broadcast %cst : f32 to vector<32x1xf32>
    %cst_2 = arith.constant dense<0.000000e+00> : vector<8x1xf32>
    %3 = tpu.matmul %1, %2, %cst_2 {dimension_numbers = #tpu.dot_dimension_numbers<[1], [0], [0], [1], [0, 0, 1, 1], [], []>} : vector<8x32xf32>, vector<32x1xf32>, vector<8x1xf32> -> vector<8x1xf32>
    %4 = arith.mulf %1, %1 : vector<8x32xf32>
    %cst_3 = arith.constant dense<0.000000e+00> : vector<8x1xf32>
    %5 = tpu.matmul %4, %2, %cst_3 {dimension_numbers = #tpu.dot_dimension_numbers<[1], [0], [0], [1], [0, 0, 1, 1], [], []>} : vector<8x32xf32>, vector<32x1xf32>, vector<8x1xf32> -> vector<8x1xf32>
    %cst_4 = arith.constant 3.125000e-02 : f32
    %6 = vector.broadcast %cst_4 : f32 to vector<8x1xf32>
    %7 = arith.mulf %3, %6 : vector<8x1xf32>
    %cst_5 = arith.constant 3.125000e-02 : f32
    %8 = vector.broadcast %cst_5 : f32 to vector<8x1xf32>
    %9 = arith.mulf %5, %8 : vector<8x1xf32>
    %10 = arith.mulf %7, %7 : vector<8x1xf32>
    %11 = arith.subf %9, %10 : vector<8x1xf32>
    %cst_6 = arith.constant 0.000000e+00 : f32
    %12 = vector.broadcast %cst_6 : f32 to vector<8x1xf32>
    %13 = arith.maximumf %11, %12 : vector<8x1xf32>
    %cst_7 = arith.constant 9.99999974E-6 : f32
    %14 = vector.broadcast %cst_7 : f32 to vector<8x1xf32>
    %15 = arith.addf %13, %14 : vector<8x1xf32>
    %16 = math.rsqrt %15 : vector<8x1xf32>
    %17 = vector.broadcast %7 : vector<8x1xf32> to vector<8x32xf32>
    %18 = arith.subf %1, %17 : vector<8x32xf32>
    %19 = vector.broadcast %16 : vector<8x1xf32> to vector<8x32xf32>
    %20 = arith.mulf %18, %19 : vector<8x32xf32>
    %c0_8 = arith.constant 0 : index
    %c0_9 = arith.constant 0 : index
    %21 = vector.load %arg2[%c0_8, %c0_9] : memref<1x32xf32, #tpu.memory_space<vmem>>, vector<1x32xf32>
    %22 = vector.shape_cast %21 : vector<1x32xf32> to vector<32xf32>
    %23 = vector.shape_cast %22 : vector<32xf32> to vector<1x32xf32>
    %24 = vector.broadcast %23 : vector<1x32xf32> to vector<8x32xf32>
    %25 = arith.mulf %20, %24 : vector<8x32xf32>
    %c0_10 = arith.constant 0 : index
    %c0_11 = arith.constant 0 : index
    %26 = vector.load %arg3[%c0_10, %c0_11] : memref<1x32xf32, #tpu.memory_space<vmem>>, vector<1x32xf32>
    %27 = vector.shape_cast %26 : vector<1x32xf32> to vector<32xf32>
    %28 = vector.shape_cast %27 : vector<32xf32> to vector<1x32xf32>
    %29 = vector.broadcast %28 : vector<1x32xf32> to vector<8x32xf32>
    %30 = arith.addf %25, %29 : vector<8x32xf32>
    %31 = tpu.transpose %30, [1, 0] : vector<8x32xf32> -> vector<32x8xf32>
    %c0_12 = arith.constant 0 : index
    %c0_13 = arith.constant 0 : index
    %c0_14 = arith.constant 0 : index
    %32 = vector.load %arg4[%c0_12, %c0_13, %c0_14] : memref<1x32x8xf32, #tpu.memory_space<vmem>>, vector<1x32x8xf32>
    %33 = vector.shape_cast %32 : vector<1x32x8xf32> to vector<32x8xf32>
    %34 = vector.shape_cast %31 : vector<32x8xf32> to vector<1x32x8xf32>
    tpu.vector_store %arg4[%c0_12, %c0_13, %c0_14], %34 {strides = array<i32>} : memref<1x32x8xf32, #tpu.memory_space<vmem>>, vector<1x32x8xf32>,
    return
  }
  func.func @transform_0(%arg0: i32) -> (i32, i32, i32) {
    %c0_i32 = arith.constant 0 : i32
    %c0_i32_0 = arith.constant 0 : i32
    %c0_i32_1 = arith.constant 0 : i32
    return %arg0, %c0_i32, %c0_i32_0 : i32, i32, i32
  }
  func.func @transform_1(%arg0: i32) -> (i32, i32) {
    %c0_i32 = arith.constant 0 : i32
    %c0_i32_0 = arith.constant 0 : i32
    %c0_i32_1 = arith.constant 0 : i32
    return %c0_i32, %c0_i32_0 : i32, i32
  }
  func.func @transform_2(%arg0: i32) -> (i32, i32) {
    %c0_i32 = arith.constant 0 : i32
    %c0_i32_0 = arith.constant 0 : i32
    %c0_i32_1 = arith.constant 0 : i32
    return %c0_i32, %c0_i32_0 : i32, i32
  }
  func.func @transform_3(%arg0: i32) -> (i32, i32, i32) {
    %c0_i32 = arith.constant 0 : i32
    %c0_i32_0 = arith.constant 0 : i32
    %c0_i32_1 = arith.constant 0 : i32
    return %arg0, %c0_i32, %c0_i32_0 : i32, i32, i32
  }
}

</mosaic_0001>

<llo_original>
// kernel: f_layer_norm.1
$region0: #{f_layer_norm.1}
  #allocation0 [shape = 'u32[]', space=smem, size = 0x4, offset = 0x4, fixed_abs, tag = 'smem constant byte address 0x4 - core index']
  #allocation1 [shape = 'u32[144,128]{1,0:T(1,128)}', space=vmem, size = 0x12000, scoped, tag = 'internal scratch']
  %s0 = inlined_call_operand.hbm [shape: f32[2,8,32], index: 0, kind: input, shape index: {}]
  %s1 = inlined_call_operand.vmem [shape: f32[1,32], index: 1, kind: input, shape index: {}]
  %s2 = inlined_call_operand.vmem [shape: f32[1,32], index: 2, kind: input, shape index: {}]
  %s3 = inlined_call_operand.vmem [shape: f32[2,32,8], index: 3, kind: output, shape index: {}]
  %s4 = sld [smem:[#allocation0]]
  $region49: #{f_layer_norm.1} parent=0
    _
  %s6 = ssub.s32 1, %s4
  %s7 = scalar_select 0, %s6, %s4
  $region1: #{f_layer_norm.1} parent=0
    #allocation2 [shape = 'u8[8192]{0}', space=vmem, size = 0x2000, scoped, tag = 'input window, operand 0']
    #allocation3 [shape = 's32[2]{0}', space=sflag, size = 0x8, scoped, tag = 'scoped memory for f_layer_norm.1']
    %8 = vsyncpa [#allocation3], 0
    %s9 = scalar_lea.sflag [#allocation3], 1
    %10 = vsyncpa %s9, 0
    loop: start=0, step=1, limit=4
    $region2: #{f_layer_norm.1} parent=1 // loop_pre_header
      _
    $region3: #{f_layer_norm.1} parent=1 // loop_header
      %s12 = sphi 0, %s16
      %p13 = scmp.ge.s32.totalorder %s12, 4
      %s22 = sphi 0, %s24
      %s25 = sphi 0, %s22
      %s26 = sphi 0, %s25
      %s42 = sphi 0, %s26
      %s46 = sphi 0, %s46
      %s48 = sphi 0, %s46
      %s49 = sphi 0, %s48
      %s63 = sphi 0, %s49
      %s67 = sphi 0, %s67
      %s69 = sphi 0, %s67
      %s70 = sphi 0, %s69
      %s84 = sphi 0, %s70
      %s90 = sphi 0, %s92
      %s93 = sphi 0, %s90
      %s94 = sphi 0, %s93
      %s110 = sphi 0, %s94
    $region4: #{f_layer_norm.1} parent=1 // loop_header_branch
      %15 = sbr.rel (%p13) target = $region8
    $region5: #{f_layer_norm.1} parent=1 // loop_body
      %s17 = ssub.s32 %s12, 1
      %s18 = ssub.s32 %s12, 2
      %s19 = sadd.s32 %s12, 1
      %s20 = ssub.s32 %s12, %s19
      %p21 = scmp.eq.s32.totalorder %s20, 0
      %s23 = sadd.s32 %s22, 1
      %s24 = scalar_select %p21, %s22, %s23
      %p27 = pneg %p21
      %p28 = scmp.eq.s32.totalorder %s12, 1
      %p29 = por %p27, %p28
      %p30 = scmp.ne.s32.totalorder %s22, %s25
      %p31 = scmp.eq.s32.totalorder %s12, 0
      %p32 = por %p30, %p31
      %p33 = scmp.ne.s32.totalorder %s22, %s25
      %p34 = scmp.eq.s32.totalorder %s17, 1
      %p35 = por %p33, %p34
      %p36 = scmp.ne.s32.totalorder %s25, %s26
      %p37 = scmp.eq.s32.totalorder %s17, 0
      %p38 = por %p36, %p37
      %p39 = scmp.ne.s32.totalorder %s25, %s26
      %p40 = scmp.eq.s32.totalorder %s18, 1
      %p41 = por %p39, %p40
      %p43 = scmp.ne.s32.totalorder %s26, %s42
      %p44 = scmp.eq.s32.totalorder %s18, 0
      %p45 = por %p43, %p44
      %s47 = sadd.s32 %s46, 1
      %p50 = scmp.eq.s32.totalorder %s12, 1
      %p51 = scmp.ne.s32.totalorder %s46, %s48
      %p52 = scmp.eq.s32.totalorder %s12, 0
      %p53 = por %p51, %p52
      %p54 = scmp.ne.s32.totalorder %s46, %s48
      %p55 = scmp.eq.s32.totalorder %s17, 1
      %p56 = por %p54, %p55
      %p57 = scmp.ne.s32.totalorder %s48, %s49
      %p58 = scmp.eq.s32.totalorder %s17, 0
      %p59 = por %p57, %p58
      %p60 = scmp.ne.s32.totalorder %s48, %s49
      %p61 = scmp.eq.s32.totalorder %s18, 1
      %p62 = por %p60, %p61
      %p64 = scmp.ne.s32.totalorder %s49, %s63
      %p65 = scmp.eq.s32.totalorder %s18, 0
      %p66 = por %p64, %p65
      %s68 = sadd.s32 %s67, 1
      %p71 = scmp.eq.s32.totalorder %s12, 1
      %p72 = scmp.ne.s32.totalorder %s67, %s69
      %p73 = scmp.eq.s32.totalorder %s12, 0
      %p74 = por %p72, %p73
      %p75 = scmp.ne.s32.totalorder %s67, %s69
      %p76 = scmp.eq.s32.totalorder %s17, 1
      %p77 = por %p75, %p76
      %p78 = scmp.ne.s32.totalorder %s69, %s70
      %p79 = scmp.eq.s32.totalorder %s17, 0
      %p80 = por %p78, %p79
      %p81 = scmp.ne.s32.totalorder %s69, %s70
      %p82 = scmp.eq.s32.totalorder %s18, 1
      %p83 = por %p81, %p82
      %p85 = scmp.ne.s32.totalorder %s70, %s84
      %p86 = scmp.eq.s32.totalorder %s18, 0
      %p87 = por %p85, %p86
      %s88 = ssub.s32 %s12, %s19
      %p89 = scmp.eq.s32.totalorder %s88, 0
      %s91 = sadd.s32 %s90, 1
      %s92 = scalar_select %p89, %s90, %s91
      %p95 = pneg %p89
      %p96 = scmp.eq.s32.totalorder %s12, 1
      %p97 = por %p95, %p96
      %p98 = scmp.ne.s32.totalorder %s90, %s93
      %p99 = scmp.eq.s32.totalorder %s12, 0
      %p100 = por %p98, %p99
      %p101 = scmp.ne.s32.totalorder %s90, %s93
      %p102 = scmp.eq.s32.totalorder %s17, 1
      %p103 = por %p101, %p102
      %p104 = scmp.ne.s32.totalorder %s93, %s94
      %p105 = scmp.eq.s32.totalorder %s17, 0
      %p106 = por %p104, %p105
      %p107 = scmp.ne.s32.totalorder %s93, %s94
      %p108 = scmp.eq.s32.totalorder %s18, 1
      %p109 = por %p107, %p108
      %p111 = scmp.ne.s32.totalorder %s94, %s110
      %p112 = scmp.eq.s32.totalorder %s18, 0
      %p113 = por %p111, %p112
      %p114 = scmp.le.s32.totalorder 1, %s12
      %p115 = scmp.lt.s32.totalorder %s12, 3
      %p116 = pnand %p114, %p115
      %p117 = pneg %p116
      // Predicated region
      $region9: #{f_layer_norm.1} parent=5 // pred_check
        _
      $region10: #{f_layer_norm.1} parent=5 // pred_check_branch
        %119 = sbr.rel (%p116) target = $region12
      $region11: #{f_layer_norm.1} parent=5 // pred_region
        %s120 = ssub.s32 %s12, 1
        // Predicated region
        $region13: #{f_layer_norm.1} parent=11 // pred_check
          %p121 = pneg %p59
        $region14: #{f_layer_norm.1} parent=11 // pred_check_branch
          %123 = sbr.rel (%p121) target = $region16
        $region15: #{f_layer_norm.1} parent=11 // pred_region
          _
        $region16: #{f_layer_norm.1} parent=11 // pred_fallthru
          _
        // Predicated region
        $region17: #{f_layer_norm.1} parent=11 // pred_check
          %p124 = pneg %p80
        $region18: #{f_layer_norm.1} parent=11 // pred_check_branch
          %126 = sbr.rel (%p124) target = $region20
        $region19: #{f_layer_norm.1} parent=11 // pred_region
          _
        $region20: #{f_layer_norm.1} parent=11 // pred_fallthru
          _
      $region12: #{f_layer_norm.1} parent=5 // pred_fallthru
        _
      %p127 = scmp.lt.s32.totalorder %s12, 2
      // Predicated region
      $region21: #{f_layer_norm.1} parent=5 // pred_check
        %p128 = pneg %p127
      $region22: #{f_layer_norm.1} parent=5 // pred_check_branch
        %130 = sbr.rel (%p128) target = $region24
      $region23: #{f_layer_norm.1} parent=5 // pred_region
        // Predicated region
        $region25: #{f_layer_norm.1} parent=23 // pred_check
          %p131 = pneg %p32
        $region26: #{f_layer_norm.1} parent=23 // pred_check_branch
          %133 = sbr.rel (%p131) target = $region28
        $region27: #{f_layer_norm.1} parent=23 // pred_region
          %s134 = sand.u32 %s22, 1
          %s135 = scalar_lea.sflag [#allocation3], %s134
          %s136 = sand.u32 %s22, 1
          %s137 = smul.addr %s136, 8
          %s138 = scalar_lea.vmem [#allocation2], %s137
          %s140 = ssub.s32 128, 128
          %141 = vsyncadd %s135, %s140
          %s142 = smul.addr %s12, 128
          %s143 = scalar_lea.hbm %s0, %s142
          %s145 = sshll.u32 %s138, 4
          %s146 = int_to_ptr.vmem [resolvable:$true] %s145
          %148 = dma.hbm_to_vmem [thread:$0]  %s143, 128, %s146, %s135
        $region28: #{f_layer_norm.1} parent=23 // pred_fallthru
          _
      $region24: #{f_layer_norm.1} parent=5 // pred_fallthru
        _
      %p149 = scmp.le.s32.totalorder 1, %s12
      %p150 = scmp.lt.s32.totalorder %s12, 3
      %p151 = pnand %p149, %p150
      %p152 = pneg %p151
      // Predicated region
      $region29: #{f_layer_norm.1} parent=5 // pred_check
        _
      $region30: #{f_layer_norm.1} parent=5 // pred_check_branch
        %154 = sbr.rel (%p151) target = $region32
      $region31: #{f_layer_norm.1} parent=5 // pred_region
        %s155 = ssub.s32 %s12, 1
        %s156 = sand.u32 %s25, 1
        %s157 = scalar_lea.sflag [#allocation3], %s156
        %s158 = sand.u32 %s25, 1
        %s159 = smul.addr %s158, 8
        %s160 = scalar_lea.vmem [#allocation2], %s159
        // Predicated region
        $region33: #{f_layer_norm.1} parent=31 // pred_check
          %p161 = pneg %p38
        $region34: #{f_layer_norm.1} parent=31 // pred_check_branch
          %163 = sbr.rel (%p161) target = $region36
        $region35: #{f_layer_norm.1} parent=31 // pred_region
          %164 = dma.done %s157, 128
        $region36: #{f_layer_norm.1} parent=31 // pred_fallthru
          _
        %s165 = sand.u32 %s25, 1
        %s166 = scalar_lea.sflag [#allocation3], %s165
        %s167 = sand.u32 %s25, 1
        %s168 = smul.addr %s167, 8
        %s169 = scalar_lea.vmem [#allocation2], %s168
        %p170 = pneg %p38
        %p171 = pneg %p35
        %p172 = pneg %p59
        %p173 = pneg %p56
        %p174 = pneg %p80
        %p175 = pneg %p77
        %p176 = pneg %p106
        %p177 = pneg %p103
        %p178 = scmp.lt.s32.totalorder %s17, 1
        %s179 = scalar_select %p178, %s17, 1
        %s180 = smul.addr %s179, 4
        %s181 = smul.addr %s180, 8
        %s182 = scalar_lea.vmem %s3, %s181
        %p183 = scmp.lt.s32.totalorder %s17, 1
        %s184 = scalar_select %p183, %s17, 1
        %s185 = smul.addr %s184, 4
        %s186 = smul.addr %s185, 8
        %s187 = scalar_lea.vmem %s3, %s186
        %v188 = vld [vmem:[%s160] sm:$0xff]
        %vm189 = vcmask 261120
        %v191 = vsel %vm189, %v188, 0
        %193 = vmatprep.subr.mxu0 0.0
        %194 = vmatpush1.msra.mxu0 0.0
        %195 = vmatprep.subr.mxu0 0.0
        %196 = vmatpush1.msra.mxu0 0.0
        %197 = vmatprep.subr.mxu0 0.0
        %198 = vmatpush1.msra.mxu0 0.0
        %199 = vmatprep.subr.mxu0 0.0
        %200 = vmatpush1.msra.mxu0 0.0
        %201 = vmatprep.subr.mxu0 0.0
        %202 = vmatpush1.msra.mxu0 0.0
        %203 = vmatprep.subr.mxu0 0.0
        %204 = vmatpush1.msra.mxu0 0.0
        %205 = vmatprep.subr.mxu0 0.0
        %206 = vmatpush1.msra.mxu0 0.0
        %207 = vmatprep.subr.mxu0 0.0
        %208 = vmatpush1.msra.mxu0 0.0
        %209 = vmatprep.subr.mxu0 0.0
        %210 = vmatpush1.msra.mxu0 0.0
        %211 = vmatprep.subr.mxu0 0.0
        %212 = vmatpush1.msra.mxu0 0.0
        %213 = vmatprep.subr.mxu0 0.0
        %214 = vmatpush1.msra.mxu0 0.0
        %215 = vmatprep.subr.mxu0 0.0
        %216 = vmatpush1.msra.mxu0 0.0
        %217 = vmatprep.subr.mxu0 0.0
        %218 = vmatpush1.msra.mxu0 1.0
        %219 = vmatprep.subr.mxu0 0.0
        %220 = vmatpush1.msra.mxu0 1.0
        %221 = vmatprep.subr.mxu0 0.0
        %222 = vmatpush1.msra.mxu0 1.0
        %223 = vmatprep.subr.mxu0 0.0
        %224 = vmatpush1.msra.mxu0 1.0
        %225 = vmatprep.subr.mxu0 0.0
        %226 = vmatpush2.msra.mxu0 0.0
        %227 = vmatprep.subr.mxu0 0.0
        %228 = vmatpush2.msra.mxu0 0.0
        %229 = vmatprep.subr.mxu0 0.0
        %230 = vmatpush2.msra.mxu0 0.0
        %231 = vmatprep.subr.mxu0 0.0
        %232 = vmatpush2.msra.mxu0 0.0
        %233 = vmatprep.subr.mxu0 0.0
        %234 = vmatpush2.msra.mxu0 0.0
        %235 = vmatprep.subr.mxu0 0.0
        %236 = vmatpush2.msra.mxu0 0.0
        %237 = vmatprep.subr.mxu0 0.0
        %238 = vmatpush2.msra.mxu0 0.0
        %239 = vmatprep.subr.mxu0 0.0
        %240 = vmatpush2.msra.mxu0 0.0
        %241 = vmatprep.subr.mxu0 0.0
        %242 = vmatpush2.msra.mxu0 0.0
        %243 = vmatprep.subr.mxu0 0.0
        %244 = vmatpush2.msra.mxu0 0.0
        %245 = vmatprep.subr.mxu0 0.0
        %246 = vmatpush2.msra.mxu0 0.0
        %247 = vmatprep.subr.mxu0 0.0
        %248 = vmatpush2.msra.mxu0 0.0
        %249 = vmatprep.subr.mxu0 0.0
        %250 = vmatpush2.msra.mxu0 0.0
        %251 = vmatprep.subr.mxu0 0.0
        %252 = vmatpush2.msra.mxu0 0.0
        %253 = vmatprep.subr.mxu0 0.0
        %254 = vmatpush2.msra.mxu0 0.0
        %255 = vmatprep.subr.mxu0 0.0
        %256 = vmatpush2.msra.mxu0 0.0
        %257 = vmatprep.mubr.f32.mxu0 0.0
        %258 = vmatmul.mubr.f32.gmra.mxu0 %v191
        %v259 = vpop.f32.mrf.mxu0
        %v260 = vadd.f32 0.0, %v259
        %v261 = vpop.f32.mrf.mxu0
        %262 = vdwg.mxu0
        %v263 = vmul.f32 %v188, %v188
        %v265 = vsel %vm189, %v263, 0
        %267 = vmatprep.subr.mxu0 0.0
        %268 = vmatpush1.msra.mxu0 0.0
        %269 = vmatprep.subr.mxu0 0.0
        %270 = vmatpush1.msra.mxu0 0.0
        %271 = vmatprep.subr.mxu0 0.0
        %272 = vmatpush1.msra.mxu0 0.0
        %273 = vmatprep.subr.mxu0 0.0
        %274 = vmatpush1.msra.mxu0 0.0
        %275 = vmatprep.subr.mxu0 0.0
        %276 = vmatpush1.msra.mxu0 0.0
        %277 = vmatprep.subr.mxu0 0.0
        %278 = vmatpush1.msra.mxu0 0.0
        %279 = vmatprep.subr.mxu0 0.0
        %280 = vmatpush1.msra.mxu0 0.0
        %281 = vmatprep.subr.mxu0 0.0
        %282 = vmatpush1.msra.mxu0 0.0
        %283 = vmatprep.subr.mxu0 0.0
        %284 = vmatpush1.msra.mxu0 0.0
        %285 = vmatprep.subr.mxu0 0.0
        %286 = vmatpush1.msra.mxu0 0.0
        %287 = vmatprep.subr.mxu0 0.0
        %288 = vmatpush1.msra.mxu0 0.0
        %289 = vmatprep.subr.mxu0 0.0
        %290 = vmatpush1.msra.mxu0 0.0
        %291 = vmatprep.subr.mxu0 0.0
        %292 = vmatpush1.msra.mxu0 1.0
        %293 = vmatprep.subr.mxu0 0.0
        %294 = vmatpush1.msra.mxu0 1.0
        %295 = vmatprep.subr.mxu0 0.0
        %296 = vmatpush1.msra.mxu0 1.0
        %297 = vmatprep.subr.mxu0 0.0
        %298 = vmatpush1.msra.mxu0 1.0
        %299 = vmatprep.subr.mxu0 0.0
        %300 = vmatpush2.msra.mxu0 0.0
        %301 = vmatprep.subr.mxu0 0.0
        %302 = vmatpush2.msra.mxu0 0.0
        %303 = vmatprep.subr.mxu0 0.0
        %304 = vmatpush2.msra.mxu0 0.0
        %305 = vmatprep.subr.mxu0 0.0
        %306 = vmatpush2.msra.mxu0 0.0
        %307 = vmatprep.subr.mxu0 0.0
        %308 = vmatpush2.msra.mxu0 0.0
        %309 = vmatprep.subr.mxu0 0.0
        %310 = vmatpush2.msra.mxu0 0.0
        %311 = vmatprep.subr.mxu0 0.0
        %312 = vmatpush2.msra.mxu0 0.0
        %313 = vmatprep.subr.mxu0 0.0
        %314 = vmatpush2.msra.mxu0 0.0
        %315 = vmatprep.subr.mxu0 0.0
        %316 = vmatpush2.msra.mxu0 0.0
        %317 = vmatprep.subr.mxu0 0.0
        %318 = vmatpush2.msra.mxu0 0.0
        %319 = vmatprep.subr.mxu0 0.0
        %320 = vmatpush2.msra.mxu0 0.0
        %321 = vmatprep.subr.mxu0 0.0
        %322 = vmatpush2.msra.mxu0 0.0
        %323 = vmatprep.subr.mxu0 0.0
        %324 = vmatpush2.msra.mxu0 0.0
        %325 = vmatprep.subr.mxu0 0.0
        %326 = vmatpush2.msra.mxu0 0.0
        %327 = vmatprep.subr.mxu0 0.0
        %328 = vmatpush2.msra.mxu0 0.0
        %329 = vmatprep.subr.mxu0 0.0
        %330 = vmatpush2.msra.mxu0 0.0
        %331 = vmatprep.mubr.f32.mxu0 0.0
        %332 = vmatmul.mubr.f32.gmra.mxu0 %v265
        %v333 = vpop.f32.mrf.mxu0
        %v334 = vadd.f32 0.0, %v333
        %v335 = vpop.f32.mrf.mxu0
        %336 = vdwg.mxu0
        %v337 = vmul.f32 %v260, 0.03125
        %v338 = vmul.f32 %v334, 0.03125
        %v339 = vmul.f32 %v337, %v337
        %v340 = vsub.f32 %v338, %v339
        %v341 = vmax.f32 %v340, 0.0
        %v342 = vadd.f32 %v341, 1e-05
        %v343 = vrsqrt.pop %v342
        %345 = vset.pattern.permute.xlu0 0
        %346 = vperm.xlu0 %345, %v337
        %v347 = vpop.permute.xlu0 %346
        %v349 = vsub.f32 %v188, %v347
        %351 = vset.pattern.permute.xlu0 0
        %352 = vperm.xlu0 %351, %v343
        %v353 = vpop.permute.xlu0 %352
        %v355 = vmul.f32 %v349, %v353
        %v356 = vld [vmem:[%s1] sm:$0x1]
        %v358 = vlaneseq
        %v359 = vshrl.u32 %v358, 7
        %v360 = vsub.s32 0, %v359
        %v361 = vrot.slane %v356, %v360
        %v363 = vmul.f32 %v355, %v361
        %v364 = vld [vmem:[%s2] sm:$0x1]
        %v366 = vlaneseq
        %v367 = vshrl.u32 %v366, 7
        %v368 = vsub.s32 0, %v367
        %v369 = vrot.slane %v364, %v368
        %v371 = vadd.f32 %v363, %v369
        %372 = vxpose.xlu0.b32.start [1/16] %v371, 128
        %373 = vxpose.xlu0.b32.cont [2/16] 0.0, 128
        %374 = vxpose.xlu0.b32.cont [3/16] 0.0, 128
        %375 = vxpose.xlu0.b32.cont [4/16] 0.0, 128
        %376 = vxpose.xlu0.b32.cont [5/16] 0.0, 128
        %377 = vxpose.xlu0.b32.cont [6/16] 0.0, 128
        %378 = vxpose.xlu0.b32.cont [7/16] 0.0, 128
        %379 = vxpose.xlu0.b32.cont [8/16] 0.0, 128
        %380 = vxpose.xlu0.b32.cont [9/16] 0.0, 128
        %381 = vxpose.xlu0.b32.cont [10/16] 0.0, 128
        %382 = vxpose.xlu0.b32.cont [11/16] 0.0, 128
        %383 = vxpose.xlu0.b32.cont [12/16] 0.0, 128
        %384 = vxpose.xlu0.b32.cont [13/16] 0.0, 128
        %385 = vxpose.xlu0.b32.cont [14/16] 0.0, 128
        %386 = vxpose.xlu0.b32.cont [15/16] 0.0, 128
        %387 = vxpose.xlu0.b32.end [16/16] 0.0, 128
        %v388 = vpop.trf.xlu0
        %v389 = vpop.trf.xlu0
        %v390 = vpop.trf.xlu0
        %v391 = vpop.trf.xlu0
        %v392 = vpop.trf.xlu0
        %v393 = vpop.trf.xlu0
        %v394 = vpop.trf.xlu0
        %v395 = vpop.trf.xlu0
        %v396 = vpop.trf.xlu0
        %v397 = vpop.trf.xlu0
        %v398 = vpop.trf.xlu0
        %v399 = vpop.trf.xlu0
        %v400 = vpop.trf.xlu0
        %v401 = vpop.trf.xlu0
        %v402 = vpop.trf.xlu0
        %v403 = vpop.trf.xlu0
        %vm404 = vcmask 64512
        %405 = vst.msk [vmem:[%s187] sm:$0xff] %vm404, %v388
        %406 = vst.msk [vmem:[%s187 + $0x8] sm:$0xff] %vm404, %v389
        %407 = vst.msk [vmem:[%s187 + $0x10] sm:$0xff] %vm404, %v390
        %408 = vst.msk [vmem:[%s187 + $0x18] sm:$0xff] %vm404, %v391
        %p409 = scmp.lt.s32.totalorder %s17, 1
        %s410 = scalar_select %p409, %s17, 1
        %s411 = smul.addr %s410, 4
        %s412 = smul.addr %s411, 8
        %s413 = scalar_lea.vmem %s3, %s412
        // Predicated region
        $region37: #{f_layer_norm.1} parent=31 // pred_check
          %p414 = pneg %p103
        $region38: #{f_layer_norm.1} parent=31 // pred_check_branch
          %416 = sbr.rel (%p414) target = $region40
        $region39: #{f_layer_norm.1} parent=31 // pred_region
          _
        $region40: #{f_layer_norm.1} parent=31 // pred_fallthru
          _
      $region32: #{f_layer_norm.1} parent=5 // pred_fallthru
        _
      %p417 = scmp.le.s32.totalorder 2, %s12
      // Predicated region
      $region41: #{f_layer_norm.1} parent=5 // pred_check
        %p418 = pneg %p417
      $region42: #{f_layer_norm.1} parent=5 // pred_check_branch
        %420 = sbr.rel (%p418) target = $region44
      $region43: #{f_layer_norm.1} parent=5 // pred_region
        %s421 = ssub.s32 %s12, 2
        // Predicated region
        $region45: #{f_layer_norm.1} parent=43 // pred_check
          %p422 = pneg %p109
        $region46: #{f_layer_norm.1} parent=43 // pred_check_branch
          %424 = sbr.rel (%p422) target = $region48
        $region47: #{f_layer_norm.1} parent=43 // pred_region
          %p425 = scmp.lt.s32.totalorder %s18, 1
          %s426 = scalar_select %p425, %s18, 1
          %s427 = smul.addr %s426, 4
          %s428 = smul.addr %s427, 8
          %s429 = scalar_lea.vmem %s3, %s428
        $region48: #{f_layer_norm.1} parent=43 // pred_fallthru
          _
      $region44: #{f_layer_norm.1} parent=5 // pred_fallthru
        _
    $region6: #{f_layer_norm.1} parent=1 // loop_footer
      %s16 = sadd.s32 1, %s12
    $region7: #{f_layer_norm.1} parent=1 // loop_footer_branch
      %11 = sbr.rel target = $region3
    $region8: #{f_layer_norm.1} parent=1 // loop_exit
      _
    %430 = vsyncpa [#allocation3], 1
    %s431 = scalar_lea.sflag [#allocation3], 1
    %432 = vsyncpa %s431, 1

</llo_original>
